<compile_context>
chip_gen: v6e
topology: v6e:2x2x1
jax: 0.10.0
libtpu: 0.0.40
codegen_flags: <defaults>
</compile_context>

<pallas_src>
import functools

import jax
import jax.numpy as jnp
from jax.experimental import pallas as pl
from jax.experimental.pallas import tpu as pltpu


def _resblock_kernel(x_ref, w1_ref, b1_ref, w2r_ref, b2r_ref, o_ref, *, d_in):
    # Cast x to bf16 once; ReLU on the bf16 copy is bit-identical to
    # ReLU-then-cast (rounding is monotone and sign/zero preserving).
    x_bf = x_ref[...].astype(jnp.bfloat16)
    h = jnp.maximum(x_bf, 0.0)                                    # ReLU(feature)

    h1 = jnp.dot(h, w1_ref[...],
                 preferred_element_type=jnp.float32) + b1_ref[...]
    h1 = jnp.maximum(h1, 0.0)                                     # ReLU(conv1(.))

    # Output stage on the packed [W2 ; W_res] weight: two dots on static Ref
    # slices, summed in f32 (no concat temporary, identical total MXU work).
    out = jnp.dot(h1.astype(jnp.bfloat16), w2r_ref[:d_in, :],
                  preferred_element_type=jnp.float32)
    out = out + jnp.dot(x_bf, w2r_ref[d_in:, :],
                        preferred_element_type=jnp.float32)
    out = out + b2r_ref[...]

    o_ref[...] = out.astype(o_ref.dtype)


def _pick_batch_tile(B):
    # Fewer, bigger grid steps: per-step overhead (~0.35 us) dwarfs the MXU
    # time of a 128-row tile at these K/N.  Cap tiles at 512 rows; for large B
    # keep >= 2 grid steps so both v7x TensorCores get work.
    if B <= 256:
        return B
    cap = min(512, B // 2)
    cands = [t for t in range(8, cap + 1, 8) if B % t == 0]
    return max(cands) if cands else B


def linear_resblock_para(x, w1, b1, w2, b2, wr, br):
    """x: (B, D_in) f32; w1: (D_in, D_in); w2, wr: (D_in, D_out); biases (1, D).

    Weights are already stored (in, out) (transposed vs nn.Linear's (out, in)).
    """
    B, D_in = x.shape
    D_out = w2.shape[1]

    # One-time parameter packing (wrapper-side, not in the kernel).
    w1_bf = w1.astype(jnp.bfloat16)
    w2r_bf = jnp.concatenate([w2, wr], axis=0).astype(jnp.bfloat16)  # (2*D_in, D_out)
    b1_f32 = b1.astype(jnp.float32)
    b2r_f32 = (b2 + br).astype(jnp.float32)

    tm = _pick_batch_tile(B)
    assert B % tm == 0 and tm % 8 == 0, "batch must tile into (8,)-aligned tm"
    assert D_in % 128 == 0 and D_out % 128 == 0, "feature dims must be lane-aligned"

    grid = (B // tm,)
    full = lambda i: (0, 0)
    row = lambda i: (i, 0)

    # Explicit scoped-VMEM budget: weights ONCE (single-buffered), biases,
    # double-buffered x/out tiles, plus slack for in-kernel f32 temporaries.
    weight_bytes = (w1_bf.size + w2r_bf.size) * 2          # bf16, 1 buffer each
    bias_bytes = (b1_f32.size + b2r_f32.size) * 4
    io_bytes = 2 * (tm * D_in * 4 + tm * D_out * 4)        # double-buffered x/out
    temp_bytes = 4 * tm * max(D_in, D_out) * 4             # h1 / out f32 temps
    vmem_limit = weight_bytes + bias_bytes + io_bytes + temp_bytes + (4 << 20)
    vmem_limit = int(max(16 << 20, min(vmem_limit, 64 << 20)))  # <= v7x physical

    kernel = functools.partial(_resblock_kernel, d_in=D_in)

    return pl.pallas_call(
        kernel,
        out_shape=jax.ShapeDtypeStruct((B, D_out), x.dtype),
        grid_spec=pltpu.PrefetchScalarGridSpec(
            num_scalar_prefetch=0,
            grid=grid,
            in_specs=[
                pl.BlockSpec((tm, D_in), row),                      # x tile
                pl.BlockSpec((D_in, D_in), full,                    # W1 (bf16)
                             pipeline_mode=pl.Buffered(1)),
                pl.BlockSpec((1, D_in), full),                      # b1 (f32)
                pl.BlockSpec((2 * D_in, D_out), full,               # [W2;W_res] (bf16)
                             pipeline_mode=pl.Buffered(1)),
                pl.BlockSpec((1, D_out), full),                     # b2+b_res (f32)
            ],
            out_specs=pl.BlockSpec((tm, D_out), row),               # lane-dense vst
        ),
        compiler_params=pltpu.CompilerParams(
            dimension_semantics=("parallel",),
            vmem_limit_bytes=vmem_limit,
        ),
    )(x, w1_bf, b1_f32, w2r_bf, b2r_f32)


def _init_linear(key, fan_in, fan_out, dtype=jnp.float32):
    # PyTorch nn.Linear default init: U(-1/sqrt(fan_in), 1/sqrt(fan_in)),
    # stored already transposed as (fan_in, fan_out).
    kw, kb = jax.random.split(key)
    bound = 1.0 / (fan_in ** 0.5)
    w = jax.random.uniform(kw, (fan_in, fan_out), dtype, -bound, bound)
    b = jax.random.uniform(kb, (1, fan_out), dtype, -bound, bound)
    return w, b


if __name__ == "__main__":
    # Small shapes consistent with the module (input_size -> output_size).
    B, D_in, D_out = 16, 256, 128

    key = jax.random.PRNGKey(0)
    kx, k1, k2, kr = jax.random.split(key, 4)

    x = jax.random.normal(kx, (B, D_in), jnp.float32)
    w1, b1 = _init_linear(k1, D_in, D_in)
    w2, b2 = _init_linear(k2, D_in, D_out)
    wr, br = _init_linear(kr, D_in, D_out)

    out = jax.block_until_ready(linear_resblock_para(x, w1, b1, w2, b2, wr, br))
    assert out.shape == (B, D_out)

    # Pure-JAX reference with the same bf16 matmul operands / f32 accumulation
    # as the kernel (the only deviation from the pure-f32 PyTorch forward is
    # the bf16 weight/operand storage chosen for HBM-bandwidth reasons).
    bf = jnp.bfloat16
    relu = lambda t: jnp.maximum(t, 0.0)
    w1_bf = w1.astype(bf)
    w2_bf = w2.astype(bf)
    wr_bf = wr.astype(bf)
    x_bf = x.astype(bf)
    h1 = relu(jnp.dot(relu(x_bf), w1_bf, preferred_element_type=jnp.float32) + b1)
    ref = (jnp.dot(h1.astype(bf), w2_bf, preferred_element_type=jnp.float32)
           + jnp.dot(x_bf, wr_bf, preferred_element_type=jnp.float32)
           + (b2 + br))

    assert jnp.allclose(out, ref, atol=1e-2, rtol=1e-2), "mismatch vs reference"

    print("KERNEL_OK")
</pallas_src>

<mosaic_0001>
module attributes {stable_mosaic.version = 11 : i64} {
  func.func @_resblock_kernel(%arg0: i32, %arg1: memref<16x256xf32, #tpu.memory_space<vmem>>, %arg2: memref<256x256xbf16, #tpu.memory_space<vmem>>, %arg3: memref<1x256xf32, #tpu.memory_space<vmem>>, %arg4: memref<512x128xbf16, #tpu.memory_space<vmem>>, %arg5: memref<1x128xf32, #tpu.memory_space<vmem>>, %arg6: memref<16x128xf32, #tpu.memory_space<vmem>>) attributes {dimension_semantics = [#tpu.dimension_semantics<parallel>], iteration_bounds = array<i64: 1>, scalar_prefetch = 0 : i64, scratch_operands = 0 : i64, tpu.core_type = #tpu.core_type<tc>, window_params = [{transform_indices = @transform_0, window_bounds = array<i64: 16, 256>}, {pipeline_mode = #tpu.pipeline_mode<synchronous>, transform_indices = @transform_1, window_bounds = array<i64: 256, 256>}, {pipeline_mode = #tpu.pipeline_mode<synchronous>, transform_indices = @transform_2, window_bounds = array<i64: 1, 256>}, {pipeline_mode = #tpu.pipeline_mode<synchronous>, transform_indices = @transform_3, window_bounds = array<i64: 512, 128>}, {pipeline_mode = #tpu.pipeline_mode<synchronous>, transform_indices = @transform_4, window_bounds = array<i64: 1, 128>}, {transform_indices = @transform_5, window_bounds = array<i64: 16, 128>}]} {
    %c0 = arith.constant 0 : index
    %c0_0 = arith.constant 0 : index
    %0 = vector.load %arg1[%c0, %c0_0] : memref<16x256xf32, #tpu.memory_space<vmem>>, vector<16x256xf32>
    %1 = arith.truncf %0 : vector<16x256xf32> to vector<16x256xbf16>
    %cst = arith.constant 0.000000e+00 : bf16
    %2 = vector.broadcast %cst : bf16 to vector<16x256xbf16>
    %3 = arith.maximumf %1, %2 : vector<16x256xbf16>
    %c0_1 = arith.constant 0 : index
    %c0_2 = arith.constant 0 : index
    %4 = vector.load %arg2[%c0_1, %c0_2] : memref<256x256xbf16, #tpu.memory_space<vmem>>, vector<256x256xbf16>
    %cst_3 = arith.constant dense<0.000000e+00> : vector<16x256xf32>
    %5 = tpu.matmul %3, %4, %cst_3 {dimension_numbers = #tpu.dot_dimension_numbers<[1], [0], [0], [1], [0, 0, 1, 1], [], []>} : vector<16x256xbf16>, vector<256x256xbf16>, vector<16x256xf32> -> vector<16x256xf32>
    %c0_4 = arith.constant 0 : index
    %c0_5 = arith.constant 0 : index
    %6 = vector.load %arg3[%c0_4, %c0_5] : memref<1x256xf32, #tpu.memory_space<vmem>>, vector<1x256xf32>
    %7 = vector.broadcast %6 : vector<1x256xf32> to vector<16x256xf32>
    %8 = arith.addf %5, %7 : vector<16x256xf32>
    %cst_6 = arith.constant 0.000000e+00 : f32
    %9 = vector.broadcast %cst_6 : f32 to vector<16x256xf32>
    %10 = arith.maximumf %8, %9 : vector<16x256xf32>
    %11 = arith.truncf %10 : vector<16x256xf32> to vector<16x256xbf16>
    %c0_7 = arith.constant 0 : index
    %c0_8 = arith.constant 0 : index
    %12 = vector.load %arg4[%c0_7, %c0_8] : memref<512x128xbf16, #tpu.memory_space<vmem>>, vector<256x128xbf16>
    %cst_9 = arith.constant dense<0.000000e+00> : vector<16x128xf32>
    %13 = tpu.matmul %11, %12, %cst_9 {dimension_numbers = #tpu.dot_dimension_numbers<[1], [0], [0], [1], [0, 0, 1, 1], [], []>} : vector<16x256xbf16>, vector<256x128xbf16>, vector<16x128xf32> -> vector<16x128xf32>
    %c256 = arith.constant 256 : index
    %c0_10 = arith.constant 0 : index
    %14 = vector.load %arg4[%c256, %c0_10] : memref<512x128xbf16, #tpu.memory_space<vmem>>, vector<256x128xbf16>
    %cst_11 = arith.constant dense<0.000000e+00> : vector<16x128xf32>
    %15 = tpu.matmul %1, %14, %cst_11 {dimension_numbers = #tpu.dot_dimension_numbers<[1], [0], [0], [1], [0, 0, 1, 1], [], []>} : vector<16x256xbf16>, vector<256x128xbf16>, vector<16x128xf32> -> vector<16x128xf32>
    %16 = arith.addf %13, %15 : vector<16x128xf32>
    %c0_12 = arith.constant 0 : index
    %c0_13 = arith.constant 0 : index
    %17 = vector.load %arg5[%c0_12, %c0_13] : memref<1x128xf32, #tpu.memory_space<vmem>>, vector<1x128xf32>
    %18 = vector.broadcast %17 : vector<1x128xf32> to vector<16x128xf32>
    %19 = arith.addf %16, %18 : vector<16x128xf32>
    %c0_14 = arith.constant 0 : index
    %c0_15 = arith.constant 0 : index
    %20 = vector.load %arg6[%c0_14, %c0_15] : memref<16x128xf32, #tpu.memory_space<vmem>>, vector<16x128xf32>
    tpu.vector_store %arg6[%c0_14, %c0_15], %19 {strides = array<i32>} : memref<16x128xf32, #tpu.memory_space<vmem>>, vector<16x128xf32>,
    return
  }
  func.func @transform_0(%arg0: i32) -> (i32, i32) {
    %c0_i32 = arith.constant 0 : i32
    %c0_i32_0 = arith.constant 0 : i32
    return %arg0, %c0_i32 : i32, i32
  }
  func.func @transform_1(%arg0: i32) -> (i32, i32) {
    %c0_i32 = arith.constant 0 : i32
    %c0_i32_0 = arith.constant 0 : i32
    %c0_i32_1 = arith.constant 0 : i32
    return %c0_i32, %c0_i32_0 : i32, i32
  }
  func.func @transform_2(%arg0: i32) -> (i32, i32) {
    %c0_i32 = arith.constant 0 : i32
    %c0_i32_0 = arith.constant 0 : i32
    %c0_i32_1 = arith.constant 0 : i32
    return %c0_i32, %c0_i32_0 : i32, i32
  }
  func.func @transform_3(%arg0: i32) -> (i32, i32) {
    %c0_i32 = arith.constant 0 : i32
    %c0_i32_0 = arith.constant 0 : i32
    %c0_i32_1 = arith.constant 0 : i32
    return %c0_i32, %c0_i32_0 : i32, i32
  }
  func.func @transform_4(%arg0: i32) -> (i32, i32) {
    %c0_i32 = arith.constant 0 : i32
    %c0_i32_0 = arith.constant 0 : i32
    %c0_i32_1 = arith.constant 0 : i32
    return %c0_i32, %c0_i32_0 : i32, i32
  }
  func.func @transform_5(%arg0: i32) -> (i32, i32) {
    %c0_i32 = arith.constant 0 : i32
    %c0_i32_0 = arith.constant 0 : i32
    return %arg0, %c0_i32 : i32, i32
  }
}

</mosaic_0001>

<llo_original>
// kernel: tpu_custom_call.1
$region0: #{tpu_custom_call.1}
  #allocation0 [shape = 'u32[]', space=smem, size = 0x4, offset = 0x4, fixed_abs, tag = 'smem constant byte address 0x4 - core index']
  #allocation1 [shape = 'u32[144,128]{1,0:T(1,128)}', space=vmem, size = 0x12000, scoped, tag = 'internal scratch']
  %s0 = inlined_call_operand.hbm [shape: f32[16,256], index: 0, kind: input, shape index: {}]
  %s1 = inlined_call_operand.hbm [shape: bf16[256,256], index: 1, kind: input, shape index: {}]
  %s2 = inlined_call_operand.vmem [shape: f32[1,256], index: 2, kind: input, shape index: {}]
  %s3 = inlined_call_operand.hbm [shape: bf16[512,128], index: 3, kind: input, shape index: {}]
  %s4 = inlined_call_operand.vmem [shape: f32[1,128], index: 4, kind: input, shape index: {}]
  %s5 = inlined_call_operand.hbm [shape: f32[16,128], index: 5, kind: output, shape index: {}]
  %s6 = sld [smem:[#allocation0]]
  $region42: #{tpu_custom_call.1} parent=0
    _
  %s8 = ssub.s32 1, %s6
  %s9 = scalar_select 0, %s8, %s6
  $region1: #{tpu_custom_call.1} parent=0
    #allocation2 [shape = 'u8[16384]{0}', space=vmem, size = 0x4000, scoped, tag = 'input window, operand 0, single buffered']
    #allocation3 [shape = 's32[1]{0}', space=sflag, size = 0x4, scoped, tag = 'scoped memory for tpu_custom_call.1']
    #allocation4 [shape = 's32[1]{0}', space=sflag, size = 0x4, scoped, tag = 'scoped memory for tpu_custom_call.1']
    #allocation5 [shape = 'u8[131072]{0}', space=vmem, size = 0x20000, scoped, tag = 'input window, operand 1, single buffered']
    #allocation6 [shape = 's32[1]{0}', space=sflag, size = 0x4, scoped, tag = 'scoped memory for tpu_custom_call.1']
    #allocation7 [shape = 'u8[131072]{0}', space=vmem, size = 0x20000, scoped, tag = 'input window, operand 3, single buffered']
    #allocation8 [shape = 'u8[8192]{0}', space=vmem, size = 0x2000, scoped, tag = 'output window, operand 0, single buffered']
    %10 = vsyncpa [#allocation3], 0
    %11 = vsyncpa [#allocation6], 0
    %12 = vsyncpa [#allocation4], 0
    // Predicated region
    $region2: #{tpu_custom_call.1} parent=1 // pred_check
      _
    $region3: #{tpu_custom_call.1} parent=1 // pred_check_branch
      %14 = sbr.rel (0) target = $region5
    $region4: #{tpu_custom_call.1} parent=1 // pred_region
      %s16 = ssub.s32 512, 512
      %17 = vsyncadd [#allocation3], %s16
      %s18 = sshll.u32 [#allocation2], 4
      %s19 = int_to_ptr.vmem [resolvable:$true] %s18
      %24 = dma.hbm_to_vmem [thread:$0]  %s0, 512, %s19, [#allocation3], 256, 256, 16
    $region5: #{tpu_custom_call.1} parent=1 // pred_fallthru
      _
    // Predicated region
    $region6: #{tpu_custom_call.1} parent=1 // pred_check
      _
    $region7: #{tpu_custom_call.1} parent=1 // pred_check_branch
      %26 = sbr.rel (0) target = $region9
    $region8: #{tpu_custom_call.1} parent=1 // pred_region
      %s28 = ssub.s32 4096, 4096
      %29 = vsyncadd [#allocation6], %s28
      %s30 = sshll.u32 [#allocation5], 4
      %s31 = int_to_ptr.vmem [resolvable:$true] %s30
      %36 = dma.hbm_to_vmem [thread:$0]  %s1, 4096, %s31, [#allocation6], 128, 128, 8
    $region9: #{tpu_custom_call.1} parent=1 // pred_fallthru
      _
    // Predicated region
    $region10: #{tpu_custom_call.1} parent=1 // pred_check
      _
    $region11: #{tpu_custom_call.1} parent=1 // pred_check_branch
      %38 = sbr.rel (0) target = $region13
    $region12: #{tpu_custom_call.1} parent=1 // pred_region
      _
    $region13: #{tpu_custom_call.1} parent=1 // pred_fallthru
      _
    // Predicated region
    $region14: #{tpu_custom_call.1} parent=1 // pred_check
      _
    $region15: #{tpu_custom_call.1} parent=1 // pred_check_branch
      %40 = sbr.rel (0) target = $region17
    $region16: #{tpu_custom_call.1} parent=1 // pred_region
      %s42 = ssub.s32 4096, 4096
      %43 = vsyncadd [#allocation6], %s42
      %s44 = sshll.u32 [#allocation7], 4
      %s45 = int_to_ptr.vmem [resolvable:$true] %s44
      %50 = dma.hbm_to_vmem [thread:$0]  %s3, 4096, %s45, [#allocation6], 64, 64, 4
    $region17: #{tpu_custom_call.1} parent=1 // pred_fallthru
      _
    // Predicated region
    $region18: #{tpu_custom_call.1} parent=1 // pred_check
      _
    $region19: #{tpu_custom_call.1} parent=1 // pred_check_branch
      %52 = sbr.rel (0) target = $region21
    $region20: #{tpu_custom_call.1} parent=1 // pred_region
      _
    $region21: #{tpu_custom_call.1} parent=1 // pred_fallthru
      _
    // Predicated region
    $region22: #{tpu_custom_call.1} parent=1 // pred_check
      _
    $region23: #{tpu_custom_call.1} parent=1 // pred_check_branch
      %54 = sbr.rel (0) target = $region25
    $region24: #{tpu_custom_call.1} parent=1 // pred_region
      %55 = dma.done [#allocation3], 512
    $region25: #{tpu_custom_call.1} parent=1 // pred_fallthru
      _
    // Predicated region
    $region26: #{tpu_custom_call.1} parent=1 // pred_check
      _
    $region27: #{tpu_custom_call.1} parent=1 // pred_check_branch
      %57 = sbr.rel (0) target = $region29
    $region28: #{tpu_custom_call.1} parent=1 // pred_region
      %58 = dma.done [#allocation6], 4096
    $region29: #{tpu_custom_call.1} parent=1 // pred_fallthru
      _
    // Predicated region
    $region30: #{tpu_custom_call.1} parent=1 // pred_check
      _
    $region31: #{tpu_custom_call.1} parent=1 // pred_check_branch
      %60 = sbr.rel (0) target = $region33
    $region32: #{tpu_custom_call.1} parent=1 // pred_region
      %61 = dma.done [#allocation6], 4096
    $region33: #{tpu_custom_call.1} parent=1 // pred_fallthru
      _
    %v63 = vld [vmem:[#allocation2] sm:$0xff]
    %v64 = vld [vmem:[#allocation2 + $0x8] sm:$0xff]
    %v65 = vld [vmem:[#allocation2 + $0x10] sm:$0xff]
    %v66 = vld [vmem:[#allocation2 + $0x18] sm:$0xff]
    %v67 = vpack.c.bf16 %v65, %v63
    %v68 = vpack.c.bf16 %v66, %v64
    %v69 = vmax.bf16 %v67, 0
    %v70 = vmax.bf16 %v68, 0
    %v71 = vld [vmem:[#allocation5] sm:$0xff]
    %v72 = vld [vmem:[#allocation5 + $0x8] sm:$0xff]
    %v73 = vld [vmem:[#allocation5 + $0x10] sm:$0xff]
    %v74 = vld [vmem:[#allocation5 + $0x18] sm:$0xff]
    %v75 = vld [vmem:[#allocation5 + $0x20] sm:$0xff]
    %v76 = vld [vmem:[#allocation5 + $0x28] sm:$0xff]
    %v77 = vld [vmem:[#allocation5 + $0x30] sm:$0xff]
    %v78 = vld [vmem:[#allocation5 + $0x38] sm:$0xff]
    %v79 = vld [vmem:[#allocation5 + $0x40] sm:$0xff]
    %v80 = vld [vmem:[#allocation5 + $0x48] sm:$0xff]
    %v81 = vld [vmem:[#allocation5 + $0x50] sm:$0xff]
    %v82 = vld [vmem:[#allocation5 + $0x58] sm:$0xff]
    %v83 = vld [vmem:[#allocation5 + $0x60] sm:$0xff]
    %v84 = vld [vmem:[#allocation5 + $0x68] sm:$0xff]
    %v85 = vld [vmem:[#allocation5 + $0x70] sm:$0xff]
    %v86 = vld [vmem:[#allocation5 + $0x78] sm:$0xff]
    %v87 = vld [vmem:[#allocation5 + $0x80] sm:$0xff]
    %v88 = vld [vmem:[#allocation5 + $0x88] sm:$0xff]
    %v89 = vld [vmem:[#allocation5 + $0x90] sm:$0xff]
    %v90 = vld [vmem:[#allocation5 + $0x98] sm:$0xff]
    %v91 = vld [vmem:[#allocation5 + $0xa0] sm:$0xff]
    %v92 = vld [vmem:[#allocation5 + $0xa8] sm:$0xff]
    %v93 = vld [vmem:[#allocation5 + $0xb0] sm:$0xff]
    %v94 = vld [vmem:[#allocation5 + $0xb8] sm:$0xff]
    %v95 = vld [vmem:[#allocation5 + $0xc0] sm:$0xff]
    %v96 = vld [vmem:[#allocation5 + $0xc8] sm:$0xff]
    %v97 = vld [vmem:[#allocation5 + $0xd0] sm:$0xff]
    %v98 = vld [vmem:[#allocation5 + $0xd8] sm:$0xff]
    %v99 = vld [vmem:[#allocation5 + $0xe0] sm:$0xff]
    %v100 = vld [vmem:[#allocation5 + $0xe8] sm:$0xff]
    %v101 = vld [vmem:[#allocation5 + $0xf0] sm:$0xff]
    %v102 = vld [vmem:[#allocation5 + $0xf8] sm:$0xff]
    %v103 = vld [vmem:[%s2] sm:$0x3]
    %v105 = vlaneseq
    %v106 = vshrl.u32 %v105, 7
    %v107 = vsub.s32 0, %v106
    %v108 = vrot.slane %v103, %v107
    %v109 = vlaneseq
    %v110 = vshrl.u32 %v109, 7
    %v111 = vsub.s32 1, %v110
    %v112 = vrot.slane %v103, %v111
    %v147 = vunpack.c.l.b16 %v71
    %v148 = vunpack.c.h.b16 %v71
    %v149 = vunpack.c.l.b16 %v72
    %v150 = vunpack.c.h.b16 %v72
    %v151 = vunpack.c.l.b16 %v73
    %v152 = vunpack.c.h.b16 %v73
    %v153 = vunpack.c.l.b16 %v74
    %v154 = vunpack.c.h.b16 %v74
    %v155 = vunpack.c.l.b16 %v75
    %v156 = vunpack.c.h.b16 %v75
    %v157 = vunpack.c.l.b16 %v76
    %v158 = vunpack.c.h.b16 %v76
    %v159 = vunpack.c.l.b16 %v77
    %v160 = vunpack.c.h.b16 %v77
    %v161 = vunpack.c.l.b16 %v78
    %v162 = vunpack.c.h.b16 %v78
    %v163 = vunpack.c.l.b16 %v79
    %v164 = vunpack.c.h.b16 %v79
    %v165 = vunpack.c.l.b16 %v80
    %v166 = vunpack.c.h.b16 %v80
    %v167 = vunpack.c.l.b16 %v81
    %v168 = vunpack.c.h.b16 %v81
    %v169 = vunpack.c.l.b16 %v82
    %v170 = vunpack.c.h.b16 %v82
    %v171 = vunpack.c.l.b16 %v83
    %v172 = vunpack.c.h.b16 %v83
    %v173 = vunpack.c.l.b16 %v84
    %v174 = vunpack.c.h.b16 %v84
    %v175 = vunpack.c.l.b16 %v85
    %v176 = vunpack.c.h.b16 %v85
    %v177 = vunpack.c.l.b16 %v86
    %v178 = vunpack.c.h.b16 %v86
    %v179 = vunpack.c.l.b16 %v87
    %v180 = vunpack.c.h.b16 %v87
    %v181 = vunpack.c.l.b16 %v88
    %v182 = vunpack.c.h.b16 %v88
    %v183 = vunpack.c.l.b16 %v89
    %v184 = vunpack.c.h.b16 %v89
    %v185 = vunpack.c.l.b16 %v90
    %v186 = vunpack.c.h.b16 %v90
    %v187 = vunpack.c.l.b16 %v91
    %v188 = vunpack.c.h.b16 %v91
    %v189 = vunpack.c.l.b16 %v92
    %v190 = vunpack.c.h.b16 %v92
    %v191 = vunpack.c.l.b16 %v93
    %v192 = vunpack.c.h.b16 %v93
    %v193 = vunpack.c.l.b16 %v94
    %v194 = vunpack.c.h.b16 %v94
    %v195 = vunpack.c.l.b16 %v95
    %v196 = vunpack.c.h.b16 %v95
    %v197 = vunpack.c.l.b16 %v96
    %v198 = vunpack.c.h.b16 %v96
    %v199 = vunpack.c.l.b16 %v97
    %v200 = vunpack.c.h.b16 %v97
    %v201 = vunpack.c.l.b16 %v98
    %v202 = vunpack.c.h.b16 %v98
    %v203 = vunpack.c.l.b16 %v99
    %v204 = vunpack.c.h.b16 %v99
    %v205 = vunpack.c.l.b16 %v100
    %v206 = vunpack.c.h.b16 %v100
    %v207 = vunpack.c.l.b16 %v101
    %v208 = vunpack.c.h.b16 %v101
    %v209 = vunpack.c.l.b16 %v102
    %v210 = vunpack.c.h.b16 %v102
    %v211 = vpack.c.b16 %v149, %v147
    %v212 = vpack.c.b16 %v150, %v148
    %v213 = vpack.c.b16 %v153, %v151
    %v214 = vpack.c.b16 %v154, %v152
    %v215 = vpack.c.b16 %v157, %v155
    %v216 = vpack.c.b16 %v158, %v156
    %v217 = vpack.c.b16 %v161, %v159
    %v218 = vpack.c.b16 %v162, %v160
    %v219 = vpack.c.b16 %v165, %v163
    %v220 = vpack.c.b16 %v166, %v164
    %v221 = vpack.c.b16 %v169, %v167
    %v222 = vpack.c.b16 %v170, %v168
    %v223 = vpack.c.b16 %v173, %v171
    %v224 = vpack.c.b16 %v174, %v172
    %v225 = vpack.c.b16 %v177, %v175
    %v226 = vpack.c.b16 %v178, %v176
    %v227 = vpack.c.b16 %v181, %v179
    %v228 = vpack.c.b16 %v182, %v180
    %v229 = vpack.c.b16 %v185, %v183
    %v230 = vpack.c.b16 %v186, %v184
    %v231 = vpack.c.b16 %v189, %v187
    %v232 = vpack.c.b16 %v190, %v188
    %v233 = vpack.c.b16 %v193, %v191
    %v234 = vpack.c.b16 %v194, %v192
    %v235 = vpack.c.b16 %v197, %v195
    %v236 = vpack.c.b16 %v198, %v196
    %v237 = vpack.c.b16 %v201, %v199
    %v238 = vpack.c.b16 %v202, %v200
    %v239 = vpack.c.b16 %v205, %v203
    %v240 = vpack.c.b16 %v206, %v204
    %v241 = vpack.c.b16 %v209, %v207
    %v242 = vpack.c.b16 %v210, %v208
    %275 = vmatprep.subr.bf16.mxu0 %v226
    %276 = vmatpush1.bf16.msra.mxu0 %v225
    %277 = vmatprep.subr.bf16.mxu0 %v224
    %278 = vmatpush1.bf16.msra.mxu0 %v223
    %279 = vmatprep.subr.bf16.mxu0 %v222
    %280 = vmatpush1.bf16.msra.mxu0 %v221
    %281 = vmatprep.subr.bf16.mxu0 %v220
    %282 = vmatpush1.bf16.msra.mxu0 %v219
    %283 = vmatprep.subr.bf16.mxu0 %v218
    %284 = vmatpush1.bf16.msra.mxu0 %v217
    %285 = vmatprep.subr.bf16.mxu0 %v216
    %286 = vmatpush1.bf16.msra.mxu0 %v215
    %287 = vmatprep.subr.bf16.mxu0 %v214
    %288 = vmatpush1.bf16.msra.mxu0 %v213
    %289 = vmatprep.subr.bf16.mxu0 %v212
    %290 = vmatpush1.bf16.msra.mxu0 %v211
    %291 = vmatprep.subr.bf16.mxu0 %v242
    %292 = vmatpush2.bf16.msra.mxu0 %v241
    %293 = vmatprep.subr.bf16.mxu0 %v240
    %294 = vmatpush2.bf16.msra.mxu0 %v239
    %295 = vmatprep.subr.bf16.mxu0 %v238
    %296 = vmatpush2.bf16.msra.mxu0 %v237
    %297 = vmatprep.subr.bf16.mxu0 %v236
    %298 = vmatpush2.bf16.msra.mxu0 %v235
    %299 = vmatprep.subr.bf16.mxu0 %v234
    %300 = vmatpush2.bf16.msra.mxu0 %v233
    %301 = vmatprep.subr.bf16.mxu0 %v232
    %302 = vmatpush2.bf16.msra.mxu0 %v231
    %303 = vmatprep.subr.bf16.mxu0 %v230
    %304 = vmatpush2.bf16.msra.mxu0 %v229
    %305 = vmatprep.subr.bf16.mxu0 %v228
    %306 = vmatpush2.bf16.msra.mxu0 %v227
    %307 = vmatprep.mubr.bf16.mxu0 %v70
    %308 = vmatmul.mubr.bf16.gmra.mxu0 %v69
    %v309 = vpop.f32.mrf.mxu0
    %v310 = vadd.f32 %v108, %v309
    %v311 = vpop.f32.mrf.mxu0
    %v312 = vadd.f32 %v112, %v311
    %v313 = vpop.f32.mrf.mxu0
    %v314 = vadd.f32 %v108, %v313
    %v315 = vpop.f32.mrf.mxu0
    %v316 = vadd.f32 %v112, %v315
    %317 = vdwg.mxu0
    %v318 = vmax.f32 %v310, 0.0
    %v319 = vmax.f32 %v312, 0.0
    %v320 = vmax.f32 %v314, 0.0
    %v321 = vmax.f32 %v316, 0.0
    %v322 = vpack.c.bf16 %v320, %v318
    %v323 = vpack.c.bf16 %v321, %v319
    %v324 = vld [vmem:[#allocation7] sm:$0xf]
    %v325 = vld [vmem:[#allocation7 + $0x4] sm:$0xf]
    %v326 = vld [vmem:[#allocation7 + $0x8] sm:$0xf]
    %v327 = vld [vmem:[#allocation7 + $0xc] sm:$0xf]
    %v328 = vld [vmem:[#allocation7 + $0x10] sm:$0xf]
    %v329 = vld [vmem:[#allocation7 + $0x14] sm:$0xf]
    %v330 = vld [vmem:[#allocation7 + $0x18] sm:$0xf]
    %v331 = vld [vmem:[#allocation7 + $0x1c] sm:$0xf]
    %v332 = vld [vmem:[#allocation7 + $0x20] sm:$0xf]
    %v333 = vld [vmem:[#allocation7 + $0x24] sm:$0xf]
    %v334 = vld [vmem:[#allocation7 + $0x28] sm:$0xf]
    %v335 = vld [vmem:[#allocation7 + $0x2c] sm:$0xf]
    %v336 = vld [vmem:[#allocation7 + $0x30] sm:$0xf]
    %v337 = vld [vmem:[#allocation7 + $0x34] sm:$0xf]
    %v338 = vld [vmem:[#allocation7 + $0x38] sm:$0xf]
    %v339 = vld [vmem:[#allocation7 + $0x3c] sm:$0xf]
    %v340 = vld [vmem:[#allocation7 + $0x40] sm:$0xf]
    %v341 = vld [vmem:[#allocation7 + $0x44] sm:$0xf]
    %v342 = vld [vmem:[#allocation7 + $0x48] sm:$0xf]
    %v343 = vld [vmem:[#allocation7 + $0x4c] sm:$0xf]
    %v344 = vld [vmem:[#allocation7 + $0x50] sm:$0xf]
    %v345 = vld [vmem:[#allocation7 + $0x54] sm:$0xf]
    %v346 = vld [vmem:[#allocation7 + $0x58] sm:$0xf]
    %v347 = vld [vmem:[#allocation7 + $0x5c] sm:$0xf]
    %v348 = vld [vmem:[#allocation7 + $0x60] sm:$0xf]
    %v349 = vld [vmem:[#allocation7 + $0x64] sm:$0xf]
    %v350 = vld [vmem:[#allocation7 + $0x68] sm:$0xf]
    %v351 = vld [vmem:[#allocation7 + $0x6c] sm:$0xf]
    %v352 = vld [vmem:[#allocation7 + $0x70] sm:$0xf]
    %v353 = vld [vmem:[#allocation7 + $0x74] sm:$0xf]
    %v354 = vld [vmem:[#allocation7 + $0x78] sm:$0xf]
    %v355 = vld [vmem:[#allocation7 + $0x7c] sm:$0xf]
    %v356 = vld [vmem:[#allocation7 + $0x80] sm:$0xf]
    %v357 = vld [vmem:[#allocation7 + $0x84] sm:$0xf]
    %v358 = vld [vmem:[#allocation7 + $0x88] sm:$0xf]
    %v359 = vld [vmem:[#allocation7 + $0x8c] sm:$0xf]
    %v360 = vld [vmem:[#allocation7 + $0x90] sm:$0xf]
    %v361 = vld [vmem:[#allocation7 + $0x94] sm:$0xf]
    %v362 = vld [vmem:[#allocation7 + $0x98] sm:$0xf]
    %v363 = vld [vmem:[#allocation7 + $0x9c] sm:$0xf]
    %v364 = vld [vmem:[#allocation7 + $0xa0] sm:$0xf]
    %v365 = vld [vmem:[#allocation7 + $0xa4] sm:$0xf]
    %v366 = vld [vmem:[#allocation7 + $0xa8] sm:$0xf]
    %v367 = vld [vmem:[#allocation7 + $0xac] sm:$0xf]
    %v368 = vld [vmem:[#allocation7 + $0xb0] sm:$0xf]
    %v369 = vld [vmem:[#allocation7 + $0xb4] sm:$0xf]
    %v370 = vld [vmem:[#allocation7 + $0xb8] sm:$0xf]
    %v371 = vld [vmem:[#allocation7 + $0xbc] sm:$0xf]
    %v372 = vld [vmem:[#allocation7 + $0xc0] sm:$0xf]
    %v373 = vld [vmem:[#allocation7 + $0xc4] sm:$0xf]
    %v374 = vld [vmem:[#allocation7 + $0xc8] sm:$0xf]
    %v375 = vld [vmem:[#allocation7 + $0xcc] sm:$0xf]
    %v376 = vld [vmem:[#allocation7 + $0xd0] sm:$0xf]
    %v377 = vld [vmem:[#allocation7 + $0xd4] sm:$0xf]
    %v378 = vld [vmem:[#allocation7 + $0xd8] sm:$0xf]
    %v379 = vld [vmem:[#allocation7 + $0xdc] sm:$0xf]
    %v380 = vld [vmem:[#allocation7 + $0xe0] sm:$0xf]
    %v381 = vld [vmem:[#allocation7 + $0xe4] sm:$0xf]
    %v382 = vld [vmem:[#allocation7 + $0xe8] sm:$0xf]
    %v383 = vld [vmem:[#allocation7 + $0xec] sm:$0xf]
    %v384 = vld [vmem:[#allocation7 + $0xf0] sm:$0xf]
    %v385 = vld [vmem:[#allocation7 + $0xf4] sm:$0xf]
    %v386 = vld [vmem:[#allocation7 + $0xf8] sm:$0xf]
    %v387 = vld [vmem:[#allocation7 + $0xfc] sm:$0xf]
    %v420 = vunpack.c.l.b16 %v356
    %v421 = vunpack.c.l.b16 %v357
    %v422 = vunpack.c.l.b16 %v358
    %v423 = vunpack.c.l.b16 %v359
    %v424 = vunpack.c.l.b16 %v360
    %v425 = vunpack.c.l.b16 %v361
    %v426 = vunpack.c.l.b16 %v362
    %v427 = vunpack.c.l.b16 %v363
    %v428 = vunpack.c.l.b16 %v364
    %v429 = vunpack.c.l.b16 %v365
    %v430 = vunpack.c.l.b16 %v366
    %v431 = vunpack.c.l.b16 %v367
    %v432 = vunpack.c.l.b16 %v368
    %v433 = vunpack.c.l.b16 %v369
    %v434 = vunpack.c.l.b16 %v370
    %v435 = vunpack.c.l.b16 %v371
    %v436 = vunpack.c.l.b16 %v372
    %v437 = vunpack.c.l.b16 %v373
    %v438 = vunpack.c.l.b16 %v374
    %v439 = vunpack.c.l.b16 %v375
    %v440 = vunpack.c.l.b16 %v376
    %v441 = vunpack.c.l.b16 %v377
    %v442 = vunpack.c.l.b16 %v378
    %v443 = vunpack.c.l.b16 %v379
    %v444 = vunpack.c.l.b16 %v380
    %v445 = vunpack.c.l.b16 %v381
    %v446 = vunpack.c.l.b16 %v382
    %v447 = vunpack.c.l.b16 %v383
    %v448 = vunpack.c.l.b16 %v384
    %v449 = vunpack.c.l.b16 %v385
    %v450 = vunpack.c.l.b16 %v386
    %v451 = vunpack.c.l.b16 %v387
    %v452 = vpack.c.b16 %v421, %v420
    %v453 = vpack.c.b16 %v423, %v422
    %v454 = vpack.c.b16 %v425, %v424
    %v455 = vpack.c.b16 %v427, %v426
    %v456 = vpack.c.b16 %v429, %v428
    %v457 = vpack.c.b16 %v431, %v430
    %v458 = vpack.c.b16 %v433, %v432
    %v459 = vpack.c.b16 %v435, %v434
    %v460 = vpack.c.b16 %v437, %v436
    %v461 = vpack.c.b16 %v439, %v438
    %v462 = vpack.c.b16 %v441, %v440
    %v463 = vpack.c.b16 %v443, %v442
    %v464 = vpack.c.b16 %v445, %v444
    %v465 = vpack.c.b16 %v447, %v446
    %v466 = vpack.c.b16 %v449, %v448
    %v467 = vpack.c.b16 %v451, %v450
    %484 = vmatprep.subr.bf16.mxu0 0
    %485 = vmatpush1.bf16.msra.mxu0 %v459
    %486 = vmatprep.subr.bf16.mxu0 0
    %487 = vmatpush1.bf16.msra.mxu0 %v458
    %488 = vmatprep.subr.bf16.mxu0 0
    %489 = vmatpush1.bf16.msra.mxu0 %v457
    %490 = vmatprep.subr.bf16.mxu0 0
    %491 = vmatpush1.bf16.msra.mxu0 %v456
    %492 = vmatprep.subr.bf16.mxu0 0
    %493 = vmatpush1.bf16.msra.mxu0 %v455
    %494 = vmatprep.subr.bf16.mxu0 0
    %495 = vmatpush1.bf16.msra.mxu0 %v454
    %496 = vmatprep.subr.bf16.mxu0 0
    %497 = vmatpush1.bf16.msra.mxu0 %v453
    %498 = vmatprep.subr.bf16.mxu0 0
    %499 = vmatpush1.bf16.msra.mxu0 %v452
    %500 = vmatprep.subr.bf16.mxu0 0
    %501 = vmatpush2.bf16.msra.mxu0 %v467
    %502 = vmatprep.subr.bf16.mxu0 0
    %503 = vmatpush2.bf16.msra.mxu0 %v466
    %504 = vmatprep.subr.bf16.mxu0 0
    %505 = vmatpush2.bf16.msra.mxu0 %v465
    %506 = vmatprep.subr.bf16.mxu0 0
    %507 = vmatpush2.bf16.msra.mxu0 %v464
    %508 = vmatprep.subr.bf16.mxu0 0
    %509 = vmatpush2.bf16.msra.mxu0 %v463
    %510 = vmatprep.subr.bf16.mxu0 0
    %511 = vmatpush2.bf16.msra.mxu0 %v462
    %512 = vmatprep.subr.bf16.mxu0 0
    %513 = vmatpush2.bf16.msra.mxu0 %v461
    %514 = vmatprep.subr.bf16.mxu0 0
    %515 = vmatpush2.bf16.msra.mxu0 %v460
    %516 = vmatprep.mubr.bf16.mxu0 %v68
    %517 = vmatmul.mubr.bf16.gmra.mxu0 %v67
    %v518 = vpop.f32.mrf.mxu0
    %v519 = vadd.f32 0.0, %v518
    %v520 = vpop.f32.mrf.mxu0
    %v521 = vpop.f32.mrf.mxu0
    %v522 = vadd.f32 0.0, %v521
    %v523 = vpop.f32.mrf.mxu0
    %524 = vdwg.mxu0
    %v557 = vunpack.c.l.b16 %v324
    %v558 = vunpack.c.l.b16 %v325
    %v559 = vunpack.c.l.b16 %v326
    %v560 = vunpack.c.l.b16 %v327
    %v561 = vunpack.c.l.b16 %v328
    %v562 = vunpack.c.l.b16 %v329
    %v563 = vunpack.c.l.b16 %v330
    %v564 = vunpack.c.l.b16 %v331
    %v565 = vunpack.c.l.b16 %v332
    %v566 = vunpack.c.l.b16 %v333
    %v567 = vunpack.c.l.b16 %v334
    %v568 = vunpack.c.l.b16 %v335
    %v569 = vunpack.c.l.b16 %v336
    %v570 = vunpack.c.l.b16 %v337
    %v571 = vunpack.c.l.b16 %v338
    %v572 = vunpack.c.l.b16 %v339
    %v573 = vunpack.c.l.b16 %v340
    %v574 = vunpack.c.l.b16 %v341
    %v575 = vunpack.c.l.b16 %v342
    %v576 = vunpack.c.l.b16 %v343
    %v577 = vunpack.c.l.b16 %v344
    %v578 = vunpack.c.l.b16 %v345
    %v579 = vunpack.c.l.b16 %v346
    %v580 = vunpack.c.l.b16 %v347
    %v581 = vunpack.c.l.b16 %v348
    %v582 = vunpack.c.l.b16 %v349
    %v583 = vunpack.c.l.b16 %v350
    %v584 = vunpack.c.l.b16 %v351
    %v585 = vunpack.c.l.b16 %v352
    %v586 = vunpack.c.l.b16 %v353
    %v587 = vunpack.c.l.b16 %v354
    %v588 = vunpack.c.l.b16 %v355
    %v589 = vpack.c.b16 %v558, %v557
    %v590 = vpack.c.b16 %v560, %v559
    %v591 = vpack.c.b16 %v562, %v561
    %v592 = vpack.c.b16 %v564, %v563
    %v593 = vpack.c.b16 %v566, %v565
    %v594 = vpack.c.b16 %v568, %v567
    %v595 = vpack.c.b16 %v570, %v569
    %v596 = vpack.c.b16 %v572, %v571
    %v597 = vpack.c.b16 %v574, %v573
    %v598 = vpack.c.b16 %v576, %v575
    %v599 = vpack.c.b16 %v578, %v577
    %v600 = vpack.c.b16 %v580, %v579
    %v601 = vpack.c.b16 %v582, %v581
    %v602 = vpack.c.b16 %v584, %v583
    %v603 = vpack.c.b16 %v586, %v585
    %v604 = vpack.c.b16 %v588, %v587
    %621 = vmatprep.subr.bf16.mxu0 0
    %622 = vmatpush1.bf16.msra.mxu0 %v596
    %623 = vmatprep.subr.bf16.mxu0 0
    %624 = vmatpush1.bf16.msra.mxu0 %v595
    %625 = vmatprep.subr.bf16.mxu0 0
    %626 = vmatpush1.bf16.msra.mxu0 %v594
    %627 = vmatprep.subr.bf16.mxu0 0
    %628 = vmatpush1.bf16.msra.mxu0 %v593
    %629 = vmatprep.subr.bf16.mxu0 0
    %630 = vmatpush1.bf16.msra.mxu0 %v592
    %631 = vmatprep.subr.bf16.mxu0 0
    %632 = vmatpush1.bf16.msra.mxu0 %v591
    %633 = vmatprep.subr.bf16.mxu0 0
    %634 = vmatpush1.bf16.msra.mxu0 %v590
    %635 = vmatprep.subr.bf16.mxu0 0
    %636 = vmatpush1.bf16.msra.mxu0 %v589
    %637 = vmatprep.subr.bf16.mxu0 0
    %638 = vmatpush2.bf16.msra.mxu0 %v604
    %639 = vmatprep.subr.bf16.mxu0 0
    %640 = vmatpush2.bf16.msra.mxu0 %v603
    %641 = vmatprep.subr.bf16.mxu0 0
    %642 = vmatpush2.bf16.msra.mxu0 %v602
    %643 = vmatprep.subr.bf16.mxu0 0
    %644 = vmatpush2.bf16.msra.mxu0 %v601
    %645 = vmatprep.subr.bf16.mxu0 0
    %646 = vmatpush2.bf16.msra.mxu0 %v600
    %647 = vmatprep.subr.bf16.mxu0 0
    %648 = vmatpush2.bf16.msra.mxu0 %v599
    %649 = vmatprep.subr.bf16.mxu0 0
    %650 = vmatpush2.bf16.msra.mxu0 %v598
    %651 = vmatprep.subr.bf16.mxu0 0
    %652 = vmatpush2.bf16.msra.mxu0 %v597
    %653 = vmatprep.mubr.bf16.mxu0 %v323
    %654 = vmatmul.mubr.bf16.gmra.mxu0 %v322
    %v655 = vpop.f32.mrf.mxu0
    %v656 = vadd.f32 %v519, %v655
    %v657 = vpop.f32.mrf.mxu0
    %v658 = vpop.f32.mrf.mxu0
    %v659 = vadd.f32 %v522, %v658
    %v660 = vpop.f32.mrf.mxu0
    %661 = vdwg.mxu0
    %v662 = vld [vmem:[%s4] sm:$0x1]
    %v664 = vlaneseq
    %v665 = vshrl.u32 %v664, 7
    %v666 = vsub.s32 0, %v665
    %v667 = vrot.slane %v662, %v666
    %v669 = vadd.f32 %v656, %v667
    %v670 = vadd.f32 %v659, %v667
    %671 = vst [vmem:[#allocation8] sm:$0xff] %v669
    %672 = vst [vmem:[#allocation8 + $0x8] sm:$0xff] %v670
    // Predicated region
    $region34: #{tpu_custom_call.1} parent=1 // pred_check
      _
    $region35: #{tpu_custom_call.1} parent=1 // pred_check_branch
      %674 = sbr.rel (0) target = $region37
    $region36: #{tpu_custom_call.1} parent=1 // pred_region
      %s676 = ssub.s32 256, 256
      %677 = vsyncadd [#allocation4], %s676
      %s678 = sshll.u32 [#allocation8], 4
      %s679 = int_to_ptr.vmem [resolvable:$true] %s678
      %684 = dma.vmem_to_hbm [thread:$0]  %s679, 256, %s5, [#allocation4], 128, 128, 8
    $region37: #{tpu_custom_call.1} parent=1 // pred_fallthru
      _
    // Predicated region
    $region38: #{tpu_custom_call.1} parent=1 // pred_check
      _
    $region39: #{tpu_custom_call.1} parent=1 // pred_check_branch
      %686 = sbr.rel (0) target = $region41
    $region40: #{tpu_custom_call.1} parent=1 // pred_region
      %687 = dma.done [#allocation4], 256
    $region41: #{tpu_custom_call.1} parent=1 // pred_fallthru
      _
    %688 = vsyncpa [#allocation3], 1
    %689 = vsyncpa [#allocation6], 1
    %690 = vsyncpa [#allocation4], 1

</llo_original>
